<compile_context>
chip_gen: v7x
topology: tpu7x:2x2x1
jax: 0.10.0
libtpu: 0.0.40
codegen_flags: <defaults>
</compile_context>

<pallas_src>
import re

import jax
import jax.numpy as jnp
from jax import lax
from jax.experimental import pallas as pl
from jax.experimental.pallas import tpu as pltpu

EMBEDDING_DIM = 32
HIDDEN_DIM = 32
N_ARY = 4
LEVEL = 2
NUM_ENC_NODES = 8
OUT_WIDTH = N_ARY * HIDDEN_DIM      # 128 lanes (== 4*HIDDEN_DIM for this config)


# ----------------------------- Pallas kernel ------------------------------ #
def _make_tree_decode_kernel(num_nodes, unroll):
    E, H = EMBEDDING_DIM, HIDDEN_DIM

    def kernel(parent_ref,      # SMEM (S,) int32 scalar-prefetch: parent slot per node
               x_ref,           # VMEM (S, E)   f32  node embeddings, DFS order
               hc0_ref,         # VMEM (1, 2H)  f32  encoder final [h | c]
               keff_ref,        # VMEM (H, N)   f32  folded attention "key" matrix
               veff_ref,        # VMEM (N, H)   f32  folded attention "value" matrix
               w_ref,           # VMEM (E+3H, 4H) bf16 [W_ih; W_hh; lin_h tiled; lin_attn tiled]
               const_ref,       # VMEM (3, 4H)  f32  [gate bias; tiled lin bias; pos-emb flat]
               out_ref,         # VMEM (S, n_ary*H) f32
               hc_states):      # VMEM scratch (S+1, 2H) f32, slot 0 = encoder state
        # Slot 0 of the recurrent-state scratch holds the encoder's final (h, c).
        hc_states[0:1, :] = hc0_ref[...]

        # Hoist all loop-invariant operands into vregs once (tile-aligned static
        # slices of the packed slabs; ~16 live vregs, no spill pressure).
        w_ih = w_ref[0:E, :]                    # (E, 4H) bf16
        w_hh = w_ref[E:E + H, :]                # (H, 4H) bf16
        lw_h = w_ref[E + H:E + 2 * H, :]        # (H, 4H) bf16  lane-tiled linear, h half
        lw_a = w_ref[E + 2 * H:E + 3 * H, :]    # (H, 4H) bf16  lane-tiled linear, attn half
        b_g = const_ref[0:1, :]                 # (1, 4H) f32   folded LSTM gate bias
        b_l = const_ref[1:2, :]                 # (1, 4H) f32   lane-tiled linear bias
        pos = const_ref[2:3, :]                 # (1, n_ary*H) f32 flattened position embeddings
        keff = keff_ref[...]                    # (H, N) f32
        veff = veff_ref[...]                    # (N, H) f32

        def body(i, carry):
            slot = parent_ref[i]                              # parent slot (0 == encoder)
            hc_prev = hc_states[pl.ds(slot, 1), :]            # (1, 2H)
            h_prev = hc_prev[:, :H]                           # (1, H)
            c_prev = hc_prev[:, H:]                           # (1, H)
            x_b = x_ref[pl.ds(i, 1), :].astype(jnp.bfloat16)  # (1, E)

            # Fused LSTMCell: one lane-dense (1, 4H) pre-activation, gates i|f|g|o.
            pre = (jnp.dot(x_b, w_ih, preferred_element_type=jnp.float32)
                   + jnp.dot(h_prev.astype(jnp.bfloat16), w_hh,
                             preferred_element_type=jnp.float32)
                   + b_g)                                     # (1, 4H) f32
            sg = jax.nn.sigmoid(pre)                          # one EUP pass over 4H lanes
            th = jnp.tanh(pre)                                # one EUP pass over 4H lanes
            c_new = sg[:, H:2 * H] * c_prev + sg[:, 0:H] * th[:, 2 * H:3 * H]
            h_lstm = sg[:, 3 * H:4 * H] * jnp.tanh(c_new)     # (1, H) f32

            # Attention with encoder projections pre-folded: 2 tiny f32 dots.
            s = jnp.dot(h_lstm, keff, preferred_element_type=jnp.float32)   # (1, N)
            s = s - jnp.max(s, axis=-1, keepdims=True)
            e = jnp.exp(s)
            attn = e / jnp.sum(e, axis=-1, keepdims=True)                   # exact softmax
            ctx = jnp.dot(attn, veff, preferred_element_type=jnp.float32)   # (1, H)

            # Lane-tiled output linear: wide[:, j*H:(j+1)*H] == linear(cat(h, ctx)) ∀j.
            wide = (jnp.dot(h_lstm.astype(jnp.bfloat16), lw_h,
                            preferred_element_type=jnp.float32)
                    + jnp.dot(ctx.astype(jnp.bfloat16), lw_a,
                              preferred_element_type=jnp.float32)
                    + b_l)                                    # (1, 4H) f32
            h_out = wide[:, 0:H]                              # (1, H)

            # Children's recurrent state = (post-linear h, LSTM cell c): single store.
            hc_states[pl.ds(i + 1, 1), :] = jnp.concatenate([h_out, c_new], axis=1)
            # Lane-dense 128-wide output row (h_out replicated n_ary times + pos emb).
            out_ref[pl.ds(i, 1), :] = wide + pos
            return carry

        lax.fori_loop(0, num_nodes, body, 0, unroll=unroll)

    return kernel


@jax.jit
def _decode_tree(parent_slots, x_all, h0, c0, enc, w_qk, w_v_t, w_slab, const_slab):
    num_nodes = x_all.shape[0]
    # Encoder-dependent attention folding (tiny, once per call, plain XLA):
    #   scores = h @ K_eff ;  ctx = softmax(scores) @ V_eff
    keff = jnp.dot(w_qk, enc.T)                   # (H, N)
    veff = jnp.dot(enc, w_v_t)                    # (N, H)
    hc0 = jnp.concatenate([h0, c0], axis=1)       # (1, 2H)

    vmem = pl.BlockSpec(memory_space=pltpu.MemorySpace.VMEM)
    kernel = _make_tree_decode_kernel(num_nodes, unroll=num_nodes <= 8)
    return pl.pallas_call(
        kernel,
        out_shape=jax.ShapeDtypeStruct((num_nodes, OUT_WIDTH), jnp.float32),
        grid_spec=pltpu.PrefetchScalarGridSpec(
            num_scalar_prefetch=1,
            grid=(1,),                            # single step; per-node loop is in-kernel
            in_specs=[vmem] * 6,
            out_specs=vmem,
            scratch_shapes=[pltpu.VMEM((num_nodes + 1, 2 * HIDDEN_DIM), jnp.float32)]),
        compiler_params=pltpu.CompilerParams(dimension_semantics=("arbitrary",)),
        # TODO(synk): for wide/deep trees, batch whole levels (B_l sibling nodes per
        # matmul) to grow the MXU M dimension; at these tree sizes the serial
        # per-node loop with resident weights is already overhead-dominated.
    )(parent_slots, x_all, hc0, keff, veff, w_slab, const_slab)


# --------------------------- parameters / glue ----------------------------- #
def init_params(key):
    ks = jax.random.split(key, 12)
    H, E = HIDDEN_DIM, EMBEDDING_DIM
    s = 1.0 / jnp.sqrt(H)
    u = lambda k, shape: jax.random.uniform(k, shape, jnp.float32, -s, s)

    # LSTMCell weights, gates packed along lanes in i|f|g|o order, pre-transposed
    # so the kernel computes x @ W (no in-kernel transpose).
    w_ih_t = u(ks[0], (E, 4 * H))
    w_hh_t = u(ks[1], (H, 4 * H))
    b_gates = u(ks[2], (1, 4 * H)) + u(ks[3], (1, 4 * H))       # b_ih + b_hh folded

    # Attention: q = h @ W_q^T ; scores = q @ W_k @ enc^T ; ctx = attn @ enc @ W_v^T.
    # W_q^T @ W_k is encoder-independent -> fold once here.
    w_q_t = u(ks[4], (H, H))
    w_k = u(ks[5], (H, H))
    w_v_t = u(ks[6], (H, H))
    w_qk = jnp.dot(w_q_t, w_k)                                  # (H, H)

    # nn.Linear(2H, H) split into h-half / attention-half, pre-transposed and
    # lane-tiled n_ary times so the output matmul is (1, n_ary*H) wide.
    lin_w_h_t = u(ks[7], (H, H))
    lin_w_a_t = u(ks[8], (H, H))
    lin_b = u(ks[9], (1, H))

    # nn.Embedding(n_ary, H) position embeddings, flattened lane-dense.
    pos_flat = jax.random.normal(ks[10], (N_ARY, H), jnp.float32).reshape(1, N_ARY * H)

    # Packed operand slabs (one DMA each instead of many tiny ones).
    w_slab = jnp.concatenate([w_ih_t, w_hh_t,
                              jnp.tile(lin_w_h_t, (1, N_ARY)),
                              jnp.tile(lin_w_a_t, (1, N_ARY))],
                             axis=0).astype(jnp.bfloat16)        # (E + 3H, 4H)
    const_slab = jnp.concatenate([b_gates,
                                  jnp.tile(lin_b, (1, N_ARY)),
                                  pos_flat], axis=0)             # (3, 4H)

    return {"w_slab": w_slab, "const_slab": const_slab,
            "w_qk": w_qk, "w_v_t": w_v_t}


class Embeddings:
    """Tiny deterministic stand-in for the `embeddings.get_embedding` API."""

    def __init__(self, vocab, dim, key):
        self.vocab = {w: i for i, w in enumerate(vocab)}
        self.table = jax.random.normal(key, (len(vocab), dim), jnp.float32)

    def get_embedding(self, lemma):
        return self.table[self.vocab[lemma]]


def syntax_transfer_decoder_forward(syntax, encoder_h, encoder_c, embeddings, params,
                                    level=LEVEL, n_ary=N_ARY):
    """Mirrors SyntaxTransferDecoder.forward for batch == 1."""
    # Host-side glue: flatten the DFS (python dict walk + regex lemma + embedding
    # lookup) into node order + parent-slot table; slot 0 = encoder final state.
    lemmas, parents = [], []

    def dfs(node, parent_slot, lvl):
        if lvl and node in syntax:
            my_slot = len(lemmas) + 1
            lemmas.append(re.sub(r"-\d+", "", node))
            parents.append(parent_slot)
            for child in syntax[node]:
                dfs(child, my_slot, lvl - 1)

    dfs("ROOT", 0, level)
    num_visited = len(lemmas)
    if num_visited == 0:
        return jnp.zeros((1, 0, HIDDEN_DIM), jnp.float32)

    x_all = jnp.stack([embeddings.get_embedding(l) for l in lemmas], axis=0)  # (S, E)
    parent_slots = jnp.asarray(parents, dtype=jnp.int32)                      # (S,)

    enc = encoder_h[0]                        # (N, H), batch == 1
    h0 = encoder_h[:, -1, :]                  # (1, H)
    c0 = encoder_c[:, -1, :]                  # (1, H)

    out_slab = _decode_tree(parent_slots, x_all, h0, c0, enc,
                            params["w_qk"], params["w_v_t"],
                            params["w_slab"], params["const_slab"])           # (S, n_ary*H)

    out = out_slab.reshape(num_visited * n_ary, HIDDEN_DIM)                   # DFS order preserved
    return out[None, ...]                                                     # (1, S*n_ary, H)


# ---------------------------------- main ----------------------------------- #
if __name__ == "__main__":
    key = jax.random.PRNGKey(0)
    k_p, k_e, k_h, k_c = jax.random.split(key, 4)

    params = init_params(k_p)
    embeddings = Embeddings(["ROOT", "S", "NP", "VP"], EMBEDDING_DIM, k_e)

    encoder_h = jax.random.normal(k_h, (1, NUM_ENC_NODES, HIDDEN_DIM), jnp.float32)
    encoder_c = jax.random.normal(k_c, (1, NUM_ENC_NODES, HIDDEN_DIM), jnp.float32)

    # level=2 -> ROOT and S-1 expand, each emitting n_ary=4 outputs -> 8 rows.
    syntax = {"ROOT": ["S-1"], "S-1": ["NP-1", "VP-1"]}

    out = syntax_transfer_decoder_forward(syntax, encoder_h, encoder_c,
                                          embeddings, params)
    out = jax.block_until_ready(out)
    assert out.shape == (1, 2 * N_ARY, HIDDEN_DIM), out.shape
    assert bool(jnp.all(jnp.isfinite(out)))
    print("KERNEL_OK")
</pallas_src>

<mosaic_0001>
module attributes {stable_mosaic.version = 11 : i64} {
  func.func @kernel(%arg0: i32, %arg1: memref<2xi32, #tpu.memory_space<smem>>, %arg2: memref<2x32xf32, #tpu.memory_space<vmem>>, %arg3: memref<1x64xf32, #tpu.memory_space<vmem>>, %arg4: memref<32x8xf32, #tpu.memory_space<vmem>>, %arg5: memref<8x32xf32, #tpu.memory_space<vmem>>, %arg6: memref<128x128xbf16, #tpu.memory_space<vmem>>, %arg7: memref<3x128xf32, #tpu.memory_space<vmem>>, %arg8: memref<2x128xf32, #tpu.memory_space<vmem>>, %arg9: memref<3x64xf32, #tpu.memory_space<vmem>>) attributes {dimension_semantics = [#tpu.dimension_semantics<arbitrary>], iteration_bounds = array<i64: 1>, scalar_prefetch = 1 : i64, scratch_operands = 1 : i64, tpu.core_type = #tpu.core_type<tc>, window_params = [{pipeline_mode = #tpu.pipeline_mode<synchronous>, transform_indices = @transform_0, window_bounds = array<i64: 2, 32>}, {pipeline_mode = #tpu.pipeline_mode<synchronous>, transform_indices = @transform_1, window_bounds = array<i64: 1, 64>}, {pipeline_mode = #tpu.pipeline_mode<synchronous>, transform_indices = @transform_2, window_bounds = array<i64: 32, 8>}, {pipeline_mode = #tpu.pipeline_mode<synchronous>, transform_indices = @transform_3, window_bounds = array<i64: 8, 32>}, {pipeline_mode = #tpu.pipeline_mode<synchronous>, transform_indices = @transform_4, window_bounds = array<i64: 128, 128>}, {pipeline_mode = #tpu.pipeline_mode<synchronous>, transform_indices = @transform_5, window_bounds = array<i64: 3, 128>}, {pipeline_mode = #tpu.pipeline_mode<synchronous>, transform_indices = @transform_6, window_bounds = array<i64: 2, 128>}]} {
    %c0 = arith.constant 0 : index
    %c0_0 = arith.constant 0 : index
    %0 = vector.load %arg3[%c0, %c0_0] : memref<1x64xf32, #tpu.memory_space<vmem>>, vector<1x64xf32>
    %c0_1 = arith.constant 0 : index
    %c0_2 = arith.constant 0 : index
    %1 = vector.load %arg9[%c0_1, %c0_2] : memref<3x64xf32, #tpu.memory_space<vmem>>, vector<1x64xf32>
    tpu.vector_store %arg9[%c0_1, %c0_2], %0 {strides = array<i32>} : memref<3x64xf32, #tpu.memory_space<vmem>>, vector<1x64xf32>,
    %c0_3 = arith.constant 0 : index
    %c0_4 = arith.constant 0 : index
    %2 = vector.load %arg6[%c0_3, %c0_4] : memref<128x128xbf16, #tpu.memory_space<vmem>>, vector<32x128xbf16>
    %c32 = arith.constant 32 : index
    %c0_5 = arith.constant 0 : index
    %3 = vector.load %arg6[%c32, %c0_5] : memref<128x128xbf16, #tpu.memory_space<vmem>>, vector<32x128xbf16>
    %c64 = arith.constant 64 : index
    %c0_6 = arith.constant 0 : index
    %4 = vector.load %arg6[%c64, %c0_6] : memref<128x128xbf16, #tpu.memory_space<vmem>>, vector<32x128xbf16>
    %c96 = arith.constant 96 : index
    %c0_7 = arith.constant 0 : index
    %5 = vector.load %arg6[%c96, %c0_7] : memref<128x128xbf16, #tpu.memory_space<vmem>>, vector<32x128xbf16>
    %c0_8 = arith.constant 0 : index
    %c0_9 = arith.constant 0 : index
    %6 = vector.load %arg7[%c0_8, %c0_9] : memref<3x128xf32, #tpu.memory_space<vmem>>, vector<1x128xf32>
    %c1 = arith.constant 1 : index
    %c0_10 = arith.constant 0 : index
    %7 = vector.load %arg7[%c1, %c0_10] : memref<3x128xf32, #tpu.memory_space<vmem>>, vector<1x128xf32>
    %c2 = arith.constant 2 : index
    %c0_11 = arith.constant 0 : index
    %8 = vector.load %arg7[%c2, %c0_11] : memref<3x128xf32, #tpu.memory_space<vmem>>, vector<1x128xf32>
    %c0_12 = arith.constant 0 : index
    %c0_13 = arith.constant 0 : index
    %9 = vector.load %arg4[%c0_12, %c0_13] : memref<32x8xf32, #tpu.memory_space<vmem>>, vector<32x8xf32>
    %c0_14 = arith.constant 0 : index
    %c0_15 = arith.constant 0 : index
    %10 = vector.load %arg5[%c0_14, %c0_15] : memref<8x32xf32, #tpu.memory_space<vmem>>, vector<8x32xf32>
    %c0_i32 = arith.constant 0 : i32
    %11 = arith.index_cast %c0_i32 : i32 to index
    %12 = memref.load %arg1[%11] : memref<2xi32, #tpu.memory_space<smem>>
    %13 = arith.index_cast %12 : i32 to index
    %c0_16 = arith.constant 0 : index
    %14 = vector.load %arg9[%13, %c0_16] : memref<3x64xf32, #tpu.memory_space<vmem>>, vector<1x64xf32>
    %15 = vector.extract_strided_slice %14 {offsets = [0, 0], sizes = [1, 32], strides = [1, 1]} : vector<1x64xf32> to vector<1x32xf32>
    %16 = vector.extract_strided_slice %14 {offsets = [0, 32], sizes = [1, 32], strides = [1, 1]} : vector<1x64xf32> to vector<1x32xf32>
    %17 = arith.index_cast %c0_i32 : i32 to index
    %c0_17 = arith.constant 0 : index
    %18 = vector.load %arg2[%17, %c0_17] : memref<2x32xf32, #tpu.memory_space<vmem>>, vector<1x32xf32>
    %19 = arith.truncf %18 : vector<1x32xf32> to vector<1x32xbf16>
    %cst = arith.constant dense<0.000000e+00> : vector<1x128xf32>
    %20 = tpu.matmul %19, %2, %cst {dimension_numbers = #tpu.dot_dimension_numbers<[1], [0], [0], [1], [0, 0, 1, 1], [], []>} : vector<1x32xbf16>, vector<32x128xbf16>, vector<1x128xf32> -> vector<1x128xf32>
    %21 = arith.truncf %15 : vector<1x32xf32> to vector<1x32xbf16>
    %cst_18 = arith.constant dense<0.000000e+00> : vector<1x128xf32>
    %22 = tpu.matmul %21, %3, %cst_18 {dimension_numbers = #tpu.dot_dimension_numbers<[1], [0], [0], [1], [0, 0, 1, 1], [], []>} : vector<1x32xbf16>, vector<32x128xbf16>, vector<1x128xf32> -> vector<1x128xf32>
    %23 = arith.addf %20, %22 : vector<1x128xf32>
    %24 = arith.addf %23, %6 : vector<1x128xf32>
    %25 = arith.negf %24 : vector<1x128xf32>
    %26 = math.exp %25 : vector<1x128xf32>
    %cst_19 = arith.constant 1.000000e+00 : f32
    %27 = vector.broadcast %cst_19 : f32 to vector<1x128xf32>
    %28 = arith.addf %27, %26 : vector<1x128xf32>
    %29 = arith.divf %27, %28 : vector<1x128xf32>
    %30 = math.tanh %24 : vector<1x128xf32>
    %31 = vector.extract_strided_slice %29 {offsets = [0, 32], sizes = [1, 32], strides = [1, 1]} : vector<1x128xf32> to vector<1x32xf32>
    %32 = arith.mulf %31, %16 : vector<1x32xf32>
    %33 = vector.extract_strided_slice %29 {offsets = [0, 0], sizes = [1, 32], strides = [1, 1]} : vector<1x128xf32> to vector<1x32xf32>
    %34 = vector.extract_strided_slice %30 {offsets = [0, 64], sizes = [1, 32], strides = [1, 1]} : vector<1x128xf32> to vector<1x32xf32>
    %35 = arith.mulf %33, %34 : vector<1x32xf32>
    %36 = arith.addf %32, %35 : vector<1x32xf32>
    %37 = vector.extract_strided_slice %29 {offsets = [0, 96], sizes = [1, 32], strides = [1, 1]} : vector<1x128xf32> to vector<1x32xf32>
    %38 = math.tanh %36 : vector<1x32xf32>
    %39 = arith.mulf %37, %38 : vector<1x32xf32>
    %cst_20 = arith.constant dense<0.000000e+00> : vector<1x8xf32>
    %40 = tpu.matmul %39, %9, %cst_20 {dimension_numbers = #tpu.dot_dimension_numbers<[1], [0], [0], [1], [0, 0, 1, 1], [], []>} : vector<1x32xf32>, vector<32x8xf32>, vector<1x8xf32> -> vector<1x8xf32>
    %cst_21 = arith.constant dense<0xFF800000> : vector<1xf32>
    %41 = vector.multi_reduction <maximumf>, %40, %cst_21 [1] : vector<1x8xf32> to vector<1xf32>
    %42 = vector.shape_cast %41 : vector<1xf32> to vector<1x1xf32>
    %43 = vector.broadcast %42 : vector<1x1xf32> to vector<1x8xf32>
    %44 = arith.subf %40, %43 : vector<1x8xf32>
    %45 = math.exp %44 : vector<1x8xf32>
    %cst_22 = arith.constant dense<0.000000e+00> : vector<1xf32>
    %46 = vector.multi_reduction <add>, %45, %cst_22 [1] : vector<1x8xf32> to vector<1xf32>
    %47 = vector.shape_cast %46 : vector<1xf32> to vector<1x1xf32>
    %48 = vector.broadcast %47 : vector<1x1xf32> to vector<1x8xf32>
    %49 = arith.divf %45, %48 : vector<1x8xf32>
    %cst_23 = arith.constant dense<0.000000e+00> : vector<1x32xf32>
    %50 = tpu.matmul %49, %10, %cst_23 {dimension_numbers = #tpu.dot_dimension_numbers<[1], [0], [0], [1], [0, 0, 1, 1], [], []>} : vector<1x8xf32>, vector<8x32xf32>, vector<1x32xf32> -> vector<1x32xf32>
    %51 = arith.truncf %39 : vector<1x32xf32> to vector<1x32xbf16>
    %cst_24 = arith.constant dense<0.000000e+00> : vector<1x128xf32>
    %52 = tpu.matmul %51, %4, %cst_24 {dimension_numbers = #tpu.dot_dimension_numbers<[1], [0], [0], [1], [0, 0, 1, 1], [], []>} : vector<1x32xbf16>, vector<32x128xbf16>, vector<1x128xf32> -> vector<1x128xf32>
    %53 = arith.truncf %50 : vector<1x32xf32> to vector<1x32xbf16>
    %cst_25 = arith.constant dense<0.000000e+00> : vector<1x128xf32>
    %54 = tpu.matmul %53, %5, %cst_25 {dimension_numbers = #tpu.dot_dimension_numbers<[1], [0], [0], [1], [0, 0, 1, 1], [], []>} : vector<1x32xbf16>, vector<32x128xbf16>, vector<1x128xf32> -> vector<1x128xf32>
    %55 = arith.addf %52, %54 : vector<1x128xf32>
    %56 = arith.addf %55, %7 : vector<1x128xf32>
    %57 = vector.extract_strided_slice %56 {offsets = [0, 0], sizes = [1, 32], strides = [1, 1]} : vector<1x128xf32> to vector<1x32xf32>
    %58 = tpu.concatenate %57, %36 in 1 : vector<1x32xf32>, vector<1x32xf32> -> vector<1x64xf32>
    %c1_i32 = arith.constant 1 : i32
    %59 = arith.addi %c0_i32, %c1_i32 : i32
    %60 = arith.index_cast %59 : i32 to index
    %c0_26 = arith.constant 0 : index
    %61 = vector.load %arg9[%60, %c0_26] : memref<3x64xf32, #tpu.memory_space<vmem>>, vector<1x64xf32>
    tpu.vector_store %arg9[%60, %c0_26], %58 {strides = array<i32>} : memref<3x64xf32, #tpu.memory_space<vmem>>, vector<1x64xf32>,
    %62 = arith.addf %56, %8 : vector<1x128xf32>
    %63 = arith.index_cast %c0_i32 : i32 to index
    %c0_27 = arith.constant 0 : index
    %64 = vector.load %arg8[%63, %c0_27] : memref<2x128xf32, #tpu.memory_space<vmem>>, vector<1x128xf32>
    tpu.vector_store %arg8[%63, %c0_27], %62 {strides = array<i32>} : memref<2x128xf32, #tpu.memory_space<vmem>>, vector<1x128xf32>,
    %c1_i32_28 = arith.constant 1 : i32
    %65 = arith.index_cast %c1_i32_28 : i32 to index
    %66 = memref.load %arg1[%65] : memref<2xi32, #tpu.memory_space<smem>>
    %67 = arith.index_cast %66 : i32 to index
    %c0_29 = arith.constant 0 : index
    %68 = vector.load %arg9[%67, %c0_29] : memref<3x64xf32, #tpu.memory_space<vmem>>, vector<1x64xf32>
    %69 = vector.extract_strided_slice %68 {offsets = [0, 0], sizes = [1, 32], strides = [1, 1]} : vector<1x64xf32> to vector<1x32xf32>
    %70 = vector.extract_strided_slice %68 {offsets = [0, 32], sizes = [1, 32], strides = [1, 1]} : vector<1x64xf32> to vector<1x32xf32>
    %71 = arith.index_cast %c1_i32_28 : i32 to index
    %c0_30 = arith.constant 0 : index
    %72 = vector.load %arg2[%71, %c0_30] : memref<2x32xf32, #tpu.memory_space<vmem>>, vector<1x32xf32>
    %73 = arith.truncf %72 : vector<1x32xf32> to vector<1x32xbf16>
    %cst_31 = arith.constant dense<0.000000e+00> : vector<1x128xf32>
    %74 = tpu.matmul %73, %2, %cst_31 {dimension_numbers = #tpu.dot_dimension_numbers<[1], [0], [0], [1], [0, 0, 1, 1], [], []>} : vector<1x32xbf16>, vector<32x128xbf16>, vector<1x128xf32> -> vector<1x128xf32>
    %75 = arith.truncf %69 : vector<1x32xf32> to vector<1x32xbf16>
    %cst_32 = arith.constant dense<0.000000e+00> : vector<1x128xf32>
    %76 = tpu.matmul %75, %3, %cst_32 {dimension_numbers = #tpu.dot_dimension_numbers<[1], [0], [0], [1], [0, 0, 1, 1], [], []>} : vector<1x32xbf16>, vector<32x128xbf16>, vector<1x128xf32> -> vector<1x128xf32>
    %77 = arith.addf %74, %76 : vector<1x128xf32>
    %78 = arith.addf %77, %6 : vector<1x128xf32>
    %79 = arith.negf %78 : vector<1x128xf32>
    %80 = math.exp %79 : vector<1x128xf32>
    %cst_33 = arith.constant 1.000000e+00 : f32
    %81 = vector.broadcast %cst_33 : f32 to vector<1x128xf32>
    %82 = arith.addf %81, %80 : vector<1x128xf32>
    %83 = arith.divf %81, %82 : vector<1x128xf32>
    %84 = math.tanh %78 : vector<1x128xf32>
    %85 = vector.extract_strided_slice %83 {offsets = [0, 32], sizes = [1, 32], strides = [1, 1]} : vector<1x128xf32> to vector<1x32xf32>
    %86 = arith.mulf %85, %70 : vector<1x32xf32>
    %87 = vector.extract_strided_slice %83 {offsets = [0, 0], sizes = [1, 32], strides = [1, 1]} : vector<1x128xf32> to vector<1x32xf32>
    %88 = vector.extract_strided_slice %84 {offsets = [0, 64], sizes = [1, 32], strides = [1, 1]} : vector<1x128xf32> to vector<1x32xf32>
    %89 = arith.mulf %87, %88 : vector<1x32xf32>
    %90 = arith.addf %86, %89 : vector<1x32xf32>
    %91 = vector.extract_strided_slice %83 {offsets = [0, 96], sizes = [1, 32], strides = [1, 1]} : vector<1x128xf32> to vector<1x32xf32>
    %92 = math.tanh %90 : vector<1x32xf32>
    %93 = arith.mulf %91, %92 : vector<1x32xf32>
    %cst_34 = arith.constant dense<0.000000e+00> : vector<1x8xf32>
    %94 = tpu.matmul %93, %9, %cst_34 {dimension_numbers = #tpu.dot_dimension_numbers<[1], [0], [0], [1], [0, 0, 1, 1], [], []>} : vector<1x32xf32>, vector<32x8xf32>, vector<1x8xf32> -> vector<1x8xf32>
    %cst_35 = arith.constant dense<0xFF800000> : vector<1xf32>
    %95 = vector.multi_reduction <maximumf>, %94, %cst_35 [1] : vector<1x8xf32> to vector<1xf32>
    %96 = vector.shape_cast %95 : vector<1xf32> to vector<1x1xf32>
    %97 = vector.broadcast %96 : vector<1x1xf32> to vector<1x8xf32>
    %98 = arith.subf %94, %97 : vector<1x8xf32>
    %99 = math.exp %98 : vector<1x8xf32>
    %cst_36 = arith.constant dense<0.000000e+00> : vector<1xf32>
    %100 = vector.multi_reduction <add>, %99, %cst_36 [1] : vector<1x8xf32> to vector<1xf32>
    %101 = vector.shape_cast %100 : vector<1xf32> to vector<1x1xf32>
    %102 = vector.broadcast %101 : vector<1x1xf32> to vector<1x8xf32>
    %103 = arith.divf %99, %102 : vector<1x8xf32>
    %cst_37 = arith.constant dense<0.000000e+00> : vector<1x32xf32>
    %104 = tpu.matmul %103, %10, %cst_37 {dimension_numbers = #tpu.dot_dimension_numbers<[1], [0], [0], [1], [0, 0, 1, 1], [], []>} : vector<1x8xf32>, vector<8x32xf32>, vector<1x32xf32> -> vector<1x32xf32>
    %105 = arith.truncf %93 : vector<1x32xf32> to vector<1x32xbf16>
    %cst_38 = arith.constant dense<0.000000e+00> : vector<1x128xf32>
    %106 = tpu.matmul %105, %4, %cst_38 {dimension_numbers = #tpu.dot_dimension_numbers<[1], [0], [0], [1], [0, 0, 1, 1], [], []>} : vector<1x32xbf16>, vector<32x128xbf16>, vector<1x128xf32> -> vector<1x128xf32>
    %107 = arith.truncf %104 : vector<1x32xf32> to vector<1x32xbf16>
    %cst_39 = arith.constant dense<0.000000e+00> : vector<1x128xf32>
    %108 = tpu.matmul %107, %5, %cst_39 {dimension_numbers = #tpu.dot_dimension_numbers<[1], [0], [0], [1], [0, 0, 1, 1], [], []>} : vector<1x32xbf16>, vector<32x128xbf16>, vector<1x128xf32> -> vector<1x128xf32>
    %109 = arith.addf %106, %108 : vector<1x128xf32>
    %110 = arith.addf %109, %7 : vector<1x128xf32>
    %111 = vector.extract_strided_slice %110 {offsets = [0, 0], sizes = [1, 32], strides = [1, 1]} : vector<1x128xf32> to vector<1x32xf32>
    %112 = tpu.concatenate %111, %90 in 1 : vector<1x32xf32>, vector<1x32xf32> -> vector<1x64xf32>
    %c1_i32_40 = arith.constant 1 : i32
    %113 = arith.addi %c1_i32_28, %c1_i32_40 : i32
    %114 = arith.index_cast %113 : i32 to index
    %c0_41 = arith.constant 0 : index
    %115 = vector.load %arg9[%114, %c0_41] : memref<3x64xf32, #tpu.memory_space<vmem>>, vector<1x64xf32>
    tpu.vector_store %arg9[%114, %c0_41], %112 {strides = array<i32>} : memref<3x64xf32, #tpu.memory_space<vmem>>, vector<1x64xf32>,
    %116 = arith.addf %110, %8 : vector<1x128xf32>
    %117 = arith.index_cast %c1_i32_28 : i32 to index
    %c0_42 = arith.constant 0 : index
    %118 = vector.load %arg8[%117, %c0_42] : memref<2x128xf32, #tpu.memory_space<vmem>>, vector<1x128xf32>
    tpu.vector_store %arg8[%117, %c0_42], %116 {strides = array<i32>} : memref<2x128xf32, #tpu.memory_space<vmem>>, vector<1x128xf32>,
    %c2_i32 = arith.constant 2 : i32
    return
  }
  func.func @transform_0(%arg0: i32, %arg1: memref<2xi32, #tpu.memory_space<smem>>) -> (i32, i32) {
    %c0_i32 = arith.constant 0 : i32
    %c0_i32_0 = arith.constant 0 : i32
    %c0_i32_1 = arith.constant 0 : i32
    return %c0_i32, %c0_i32_0 : i32, i32
  }
  func.func @transform_1(%arg0: i32, %arg1: memref<2xi32, #tpu.memory_space<smem>>) -> (i32, i32) {
    %c0_i32 = arith.constant 0 : i32
    %c0_i32_0 = arith.constant 0 : i32
    %c0_i32_1 = arith.constant 0 : i32
    return %c0_i32, %c0_i32_0 : i32, i32
  }
  func.func @transform_2(%arg0: i32, %arg1: memref<2xi32, #tpu.memory_space<smem>>) -> (i32, i32) {
    %c0_i32 = arith.constant 0 : i32
    %c0_i32_0 = arith.constant 0 : i32
    %c0_i32_1 = arith.constant 0 : i32
    return %c0_i32, %c0_i32_0 : i32, i32
  }
  func.func @transform_3(%arg0: i32, %arg1: memref<2xi32, #tpu.memory_space<smem>>) -> (i32, i32) {
    %c0_i32 = arith.constant 0 : i32
    %c0_i32_0 = arith.constant 0 : i32
    %c0_i32_1 = arith.constant 0 : i32
    return %c0_i32, %c0_i32_0 : i32, i32
  }
  func.func @transform_4(%arg0: i32, %arg1: memref<2xi32, #tpu.memory_space<smem>>) -> (i32, i32) {
    %c0_i32 = arith.constant 0 : i32
    %c0_i32_0 = arith.constant 0 : i32
    %c0_i32_1 = arith.constant 0 : i32
    return %c0_i32, %c0_i32_0 : i32, i32
  }
  func.func @transform_5(%arg0: i32, %arg1: memref<2xi32, #tpu.memory_space<smem>>) -> (i32, i32) {
    %c0_i32 = arith.constant 0 : i32
    %c0_i32_0 = arith.constant 0 : i32
    %c0_i32_1 = arith.constant 0 : i32
    return %c0_i32, %c0_i32_0 : i32, i32
  }
  func.func @transform_6(%arg0: i32, %arg1: memref<2xi32, #tpu.memory_space<smem>>) -> (i32, i32) {
    %c0_i32 = arith.constant 0 : i32
    %c0_i32_0 = arith.constant 0 : i32
    %c0_i32_1 = arith.constant 0 : i32
    return %c0_i32, %c0_i32_0 : i32, i32
  }
}

</mosaic_0001>

<llo_original>
// kernel: _decode_tree.1
$region0: #{_decode_tree.1}
  #allocation0 [shape = 'u32[]', space=smem, size = 0x4, offset = 0x4, fixed_abs, tag = 'smem constant byte address 0x4 - core index']
  #allocation1 [shape = 'u32[144,128]{1,0:T(1,128)}', space=vmem, size = 0x12000, scoped, tag = 'internal scratch']
  #allocation2 [shape = 'f32[3,64]{1,0:T(4,128)}', space=vmem, size = 0x800, scoped, tag = 'scratch operand']
  #allocation3 [shape = 's32[1]{0}', space=sflag, size = 0x4, scoped, tag = 'scoped memory for _decode_tree.1']
  #allocation4 [shape = 'u8[512]{0}', space=smem, size = 0x200, scoped, tag = 'prefetched SMEM operand 0']
  %s0 = inlined_call_operand.vmem [shape: s32[2], index: 0, kind: input, shape index: {}]
  %s1 = inlined_call_operand.vmem [shape: f32[2,32], index: 1, kind: input, shape index: {}]
  %s2 = inlined_call_operand.vmem [shape: f32[1,64], index: 2, kind: input, shape index: {}]
  %s3 = inlined_call_operand.vmem [shape: f32[32,8], index: 3, kind: input, shape index: {}]
  %s4 = inlined_call_operand.vmem [shape: f32[8,32], index: 4, kind: input, shape index: {}]
  %s5 = inlined_call_operand.vmem [shape: bf16[128,128], index: 5, kind: input, shape index: {}]
  %s6 = inlined_call_operand.vmem [shape: f32[3,128], index: 6, kind: input, shape index: {}]
  %s7 = inlined_call_operand.hbm [shape: f32[2,128], index: 7, kind: output, shape index: {}]
  %s8 = sld [smem:[#allocation0]]
  $region34: #{_decode_tree.1} parent=0
    _
  %s10 = ssub.s32 1, %s8
  %s11 = scalar_select 0, %s10, %s8
  %s12 = sshll.u32 %s0, 4
  %s13 = int_to_ptr.vmem [resolvable:$true] %s12
  %15 = dma.vmem_to_smem %s13, 16, [#allocation4], [#allocation3]
  %16 = dma.done [#allocation3], 16
  %17 = sfence
  $region1: #{_decode_tree.1} parent=0
    #allocation5 [shape = 'u8[1024]{0}', space=vmem, size = 0x400, scoped, tag = 'output window, operand 0, single buffered']
    #allocation6 [shape = 's32[1]{0}', space=sflag, size = 0x4, scoped, tag = 'scoped memory for _decode_tree.1']
    %18 = vsyncpa [#allocation6], 0
    // Predicated region
    $region2: #{_decode_tree.1} parent=1 // pred_check
      _
    $region3: #{_decode_tree.1} parent=1 // pred_check_branch
      %20 = sbr.rel (0) target = $region5
    $region4: #{_decode_tree.1} parent=1 // pred_region
      _
    $region5: #{_decode_tree.1} parent=1 // pred_fallthru
      _
    // Predicated region
    $region6: #{_decode_tree.1} parent=1 // pred_check
      _
    $region7: #{_decode_tree.1} parent=1 // pred_check_branch
      %22 = sbr.rel (0) target = $region9
    $region8: #{_decode_tree.1} parent=1 // pred_region
      _
    $region9: #{_decode_tree.1} parent=1 // pred_fallthru
      _
    // Predicated region
    $region10: #{_decode_tree.1} parent=1 // pred_check
      _
    $region11: #{_decode_tree.1} parent=1 // pred_check_branch
      %24 = sbr.rel (0) target = $region13
    $region12: #{_decode_tree.1} parent=1 // pred_region
      _
    $region13: #{_decode_tree.1} parent=1 // pred_fallthru
      _
    // Predicated region
    $region14: #{_decode_tree.1} parent=1 // pred_check
      _
    $region15: #{_decode_tree.1} parent=1 // pred_check_branch
      %26 = sbr.rel (0) target = $region17
    $region16: #{_decode_tree.1} parent=1 // pred_region
      _
    $region17: #{_decode_tree.1} parent=1 // pred_fallthru
      _
    // Predicated region
    $region18: #{_decode_tree.1} parent=1 // pred_check
      _
    $region19: #{_decode_tree.1} parent=1 // pred_check_branch
      %28 = sbr.rel (0) target = $region21
    $region20: #{_decode_tree.1} parent=1 // pred_region
      _
    $region21: #{_decode_tree.1} parent=1 // pred_fallthru
      _
    // Predicated region
    $region22: #{_decode_tree.1} parent=1 // pred_check
      _
    $region23: #{_decode_tree.1} parent=1 // pred_check_branch
      %30 = sbr.rel (0) target = $region25
    $region24: #{_decode_tree.1} parent=1 // pred_region
      _
    $region25: #{_decode_tree.1} parent=1 // pred_fallthru
      _
    %v32 = vld [vmem:[%s2] sm:$0x1]
    %vm33 = vcmask 516096
    %34 = vst.msk [vmem:[#allocation2] sm:$0x1] %vm33, %v32
    %v35 = vld [vmem:[%s5] sm:$0xf]
    %v36 = vld [vmem:[%s5 + $0x4] sm:$0xf]
    %v37 = vld [vmem:[%s5 + $0x8] sm:$0xf]
    %v38 = vld [vmem:[%s5 + $0xc] sm:$0xf]
    %v39 = vld [vmem:[%s5 + $0x10] sm:$0xf]
    %v40 = vld [vmem:[%s5 + $0x14] sm:$0xf]
    %v41 = vld [vmem:[%s5 + $0x18] sm:$0xf]
    %v42 = vld [vmem:[%s5 + $0x1c] sm:$0xf]
    %v43 = vld [vmem:[%s5 + $0x20] sm:$0xf]
    %v44 = vld [vmem:[%s5 + $0x24] sm:$0xf]
    %v45 = vld [vmem:[%s5 + $0x28] sm:$0xf]
    %v46 = vld [vmem:[%s5 + $0x2c] sm:$0xf]
    %v47 = vld [vmem:[%s5 + $0x30] sm:$0xf]
    %v48 = vld [vmem:[%s5 + $0x34] sm:$0xf]
    %v49 = vld [vmem:[%s5 + $0x38] sm:$0xf]
    %v50 = vld [vmem:[%s5 + $0x3c] sm:$0xf]
    %v51 = vld [vmem:[%s6] sm:$0x1]
    %v52 = vld [vmem:[%s6 + $0x1] sm:$0x1]
    %v53 = vld [vmem:[%s6 + $0x2] sm:$0x1]
    %v54 = vld [vmem:[%s3] sm:$0xff]
    %v55 = vld [vmem:[%s3 + $0x8] sm:$0xff]
    %v56 = vld [vmem:[%s3 + $0x10] sm:$0xff]
    %v57 = vld [vmem:[%s3 + $0x18] sm:$0xff]
    %v58 = vld [vmem:[%s4] sm:$0xff]
    %s59 = sld [smem:[#allocation4]]
    %s60 = scalar_lea.vmem [#allocation2], %s59
    %v61 = vld [vmem:[%s60] sm:$0x1]
    %v62 = vld [vmem:[%s1] sm:$0x1]
    %v63 = vpack.c.bf16 %v62, %v62
    %v64 = vpack.c.bf16 %v61, %v61
    %v69 = vunpack.c.l.b16 %v39
    %v70 = vunpack.c.l.b16 %v40
    %v71 = vunpack.c.l.b16 %v41
    %v72 = vunpack.c.l.b16 %v42
    %v73 = vpack.c.b16 %v70, %v69
    %v74 = vpack.c.b16 %v72, %v71
    %vm77 = vcmask 261120
    %v79 = vsel %vm77, %v64, 0
    %81 = vmatprep.subr.bf16.mxu0 0
    %82 = vmatpush1.bf16.msra.mxu0 %v73
    %83 = vmatprep.subr.bf16.mxu0 0
    %84 = vmatpush1.bf16.msra.mxu0 %v74
    %85 = vmatprep.subr.bf16.mxu0 0
    %86 = vmatpush1.bf16.msra.mxu0 0
    %87 = vmatprep.subr.bf16.mxu0 0
    %88 = vmatpush1.bf16.msra.mxu0 0
    %89 = vmatprep.subr.bf16.mxu0 0
    %90 = vmatpush1.bf16.msra.mxu0 0
    %91 = vmatprep.subr.bf16.mxu0 0
    %92 = vmatpush1.bf16.msra.mxu0 0
    %93 = vmatprep.subr.bf16.mxu0 0
    %94 = vmatpush1.bf16.msra.mxu0 0
    %95 = vmatprep.subr.bf16.mxu0 0
    %96 = vmatpush1.bf16.msra.mxu0 0
    %97 = vmatprep.subr.bf16.mxu0 0
    %98 = vmatpush1.bf16.msra.mxu0 0
    %99 = vmatprep.subr.bf16.mxu0 0
    %100 = vmatpush1.bf16.msra.mxu0 0
    %101 = vmatprep.subr.bf16.mxu0 0
    %102 = vmatpush1.bf16.msra.mxu0 0
    %103 = vmatprep.subr.bf16.mxu0 0
    %104 = vmatpush1.bf16.msra.mxu0 0
    %105 = vmatprep.subr.bf16.mxu0 0
    %106 = vmatpush1.bf16.msra.mxu0 0
    %107 = vmatprep.subr.bf16.mxu0 0
    %108 = vmatpush1.bf16.msra.mxu0 0
    %109 = vmatprep.subr.bf16.mxu0 0
    %110 = vmatpush1.bf16.msra.mxu0 0
    %111 = vmatprep.subr.bf16.mxu0 0
    %112 = vmatpush1.bf16.msra.mxu0 0
    %113 = vmatprep.mubr.bf16.mxu0 0
    %114 = vmatmul.mubr.bf16.gmra.mrb[0].mxu0 %v79
    %v115 = vpop.f32.mrb[0].mxu0
    %v116 = vadd.f32 0.0, %v115
    %v117 = vpop.f32.mrb[0].mxu0
    %v118 = vpop.f32.mrb[0].mxu0
    %v119 = vpop.f32.mrb[0].mxu0
    %120 = vdwg.mxu0
    %v125 = vunpack.c.l.b16 %v35
    %v126 = vunpack.c.l.b16 %v36
    %v127 = vunpack.c.l.b16 %v37
    %v128 = vunpack.c.l.b16 %v38
    %v129 = vpack.c.b16 %v126, %v125
    %v130 = vpack.c.b16 %v128, %v127
    %v134 = vsel %vm77, %v63, 0
    %136 = vmatprep.subr.bf16.mxu0 0
    %137 = vmatpush1.bf16.msra.mxu0 %v129
    %138 = vmatprep.subr.bf16.mxu0 0
    %139 = vmatpush1.bf16.msra.mxu0 %v130
    %140 = vmatprep.subr.bf16.mxu0 0
    %141 = vmatpush1.bf16.msra.mxu0 0
    %142 = vmatprep.subr.bf16.mxu0 0
    %143 = vmatpush1.bf16.msra.mxu0 0
    %144 = vmatprep.subr.bf16.mxu0 0
    %145 = vmatpush1.bf16.msra.mxu0 0
    %146 = vmatprep.subr.bf16.mxu0 0
    %147 = vmatpush1.bf16.msra.mxu0 0
    %148 = vmatprep.subr.bf16.mxu0 0
    %149 = vmatpush1.bf16.msra.mxu0 0
    %150 = vmatprep.subr.bf16.mxu0 0
    %151 = vmatpush1.bf16.msra.mxu0 0
    %152 = vmatprep.subr.bf16.mxu0 0
    %153 = vmatpush1.bf16.msra.mxu0 0
    %154 = vmatprep.subr.bf16.mxu0 0
    %155 = vmatpush1.bf16.msra.mxu0 0
    %156 = vmatprep.subr.bf16.mxu0 0
    %157 = vmatpush1.bf16.msra.mxu0 0
    %158 = vmatprep.subr.bf16.mxu0 0
    %159 = vmatpush1.bf16.msra.mxu0 0
    %160 = vmatprep.subr.bf16.mxu0 0
    %161 = vmatpush1.bf16.msra.mxu0 0
    %162 = vmatprep.subr.bf16.mxu0 0
    %163 = vmatpush1.bf16.msra.mxu0 0
    %164 = vmatprep.subr.bf16.mxu0 0
    %165 = vmatpush1.bf16.msra.mxu0 0
    %166 = vmatprep.subr.bf16.mxu0 0
    %167 = vmatpush1.bf16.msra.mxu0 0
    %168 = vmatprep.mubr.bf16.mxu0 0
    %169 = vmatmul.mubr.bf16.gmra.mrb[0].mxu0 %v134
    %v170 = vpop.f32.mrb[0].mxu0
    %v171 = vadd.f32 %v116, %v170
    %v172 = vpop.f32.mrb[0].mxu0
    %v173 = vpop.f32.mrb[0].mxu0
    %v174 = vpop.f32.mrb[0].mxu0
    %175 = vdwg.mxu0
    %v176 = vadd.f32 %v171, %v51
    %v177 = vxor.u32 %v176, 2147483648
    %v178 = vmul.f32 %v177, 1.442695
    %v179 = vpow.pop %v178
    %v180 = vadd.f32 %v179, 1.0
    %v181 = vrcp.pop %v180
    %v182 = vmul.f32 1.0, %v181
    %v183 = vtanh.pop %v176
    %v184 = vmul.f32 %v182, %v61
    %186 = vrot.lane.b32.xlu0 %v183, 64
    %v187 = vpop.permute.xlu0 %186
    %v189 = vmul.f32 %v182, %v187
    %191 = vrot.lane.b32.xlu0 %v189, 32
    %v192 = vpop.permute.xlu0 %191
    %v194 = vadd.f32 %v184, %v192
    %v195 = vtanh.pop %v194
    %197 = vrot.lane.b32.xlu0 %v195, 64
    %v198 = vpop.permute.xlu0 %197
    %v200 = vmul.f32 %v182, %v198
    %202 = vrot.lane.b32.xlu0 %v200, 32
    %v203 = vpop.permute.xlu0 %202
    %v204 = vsel %vm77, %v203, 0
    %206 = vmatprep.subr.mxu0 0.0
    %207 = vmatpush1.msra.mxu0 %v54
    %208 = vmatprep.subr.mxu0 0.0
    %209 = vmatpush1.msra.mxu0 %v55
    %210 = vmatprep.subr.mxu0 0.0
    %211 = vmatpush1.msra.mxu0 %v56
    %212 = vmatprep.subr.mxu0 0.0
    %213 = vmatpush1.msra.mxu0 %v57
    %214 = vmatprep.subr.mxu0 0.0
    %215 = vmatpush1.msra.mxu0 0.0
    %216 = vmatprep.subr.mxu0 0.0
    %217 = vmatpush1.msra.mxu0 0.0
    %218 = vmatprep.subr.mxu0 0.0
    %219 = vmatpush1.msra.mxu0 0.0
    %220 = vmatprep.subr.mxu0 0.0
    %221 = vmatpush1.msra.mxu0 0.0
    %222 = vmatprep.subr.mxu0 0.0
    %223 = vmatpush1.msra.mxu0 0.0
    %224 = vmatprep.subr.mxu0 0.0
    %225 = vmatpush1.msra.mxu0 0.0
    %226 = vmatprep.subr.mxu0 0.0
    %227 = vmatpush1.msra.mxu0 0.0
    %228 = vmatprep.subr.mxu0 0.0
    %229 = vmatpush1.msra.mxu0 0.0
    %230 = vmatprep.subr.mxu0 0.0
    %231 = vmatpush1.msra.mxu0 0.0
    %232 = vmatprep.subr.mxu0 0.0
    %233 = vmatpush1.msra.mxu0 0.0
    %234 = vmatprep.subr.mxu0 0.0
    %235 = vmatpush1.msra.mxu0 0.0
    %236 = vmatprep.subr.mxu0 0.0
    %237 = vmatpush1.msra.mxu0 0.0
    %238 = vmatprep.subr.mxu0 0.0
    %239 = vmatpush1.msra.mxu0 0.0
    %240 = vmatprep.subr.mxu0 0.0
    %241 = vmatpush1.msra.mxu0 0.0
    %242 = vmatprep.subr.mxu0 0.0
    %243 = vmatpush1.msra.mxu0 0.0
    %244 = vmatprep.subr.mxu0 0.0
    %245 = vmatpush1.msra.mxu0 0.0
    %246 = vmatprep.subr.mxu0 0.0
    %247 = vmatpush1.msra.mxu0 0.0
    %248 = vmatprep.subr.mxu0 0.0
    %249 = vmatpush1.msra.mxu0 0.0
    %250 = vmatprep.subr.mxu0 0.0
    %251 = vmatpush1.msra.mxu0 0.0
    %252 = vmatprep.subr.mxu0 0.0
    %253 = vmatpush1.msra.mxu0 0.0
    %254 = vmatprep.subr.mxu0 0.0
    %255 = vmatpush1.msra.mxu0 0.0
    %256 = vmatprep.subr.mxu0 0.0
    %257 = vmatpush1.msra.mxu0 0.0
    %258 = vmatprep.subr.mxu0 0.0
    %259 = vmatpush1.msra.mxu0 0.0
    %260 = vmatprep.subr.mxu0 0.0
    %261 = vmatpush1.msra.mxu0 0.0
    %262 = vmatprep.subr.mxu0 0.0
    %263 = vmatpush1.msra.mxu0 0.0
    %264 = vmatprep.subr.mxu0 0.0
    %265 = vmatpush1.msra.mxu0 0.0
    %266 = vmatprep.subr.mxu0 0.0
    %267 = vmatpush1.msra.mxu0 0.0
    %268 = vmatprep.subr.mxu0 0.0
    %269 = vmatpush1.msra.mxu0 0.0
    %270 = vmatprep.mubr.f32.mxu0 0.0
    %271 = vmatmul.mubr.f32.gmra.mrb[0].mxu0 %v204
    %v272 = vpop.f32.mrb[0].mxu0
    %v273 = vadd.f32 0.0, %v272
    %v274 = vpop.f32.mrb[0].mxu0
    %275 = vdwg.mxu0
    %vm276 = vcmask 57344
    %v277 = vsel %vm276, %v273, -inf
    %278 = vmax.xlane.f32.xlu0 %v277
    %v279 = vpop.xlane.xlu0 %278
    %v280 = vsub.f32 %v273, %v279
    %v281 = vmul.f32 %v280, 1.442695
    %v282 = vpow.pop %v281
    %v283 = vsel %vm276, %v282, 0.0
    %284 = vadd.xlane.f32.xlu0 %v283
    %v285 = vpop.xlane.xlu0 %284
    %v286 = vrcp.pop %v285
    %v287 = vmul.f32 %v282, %v286
    %vm288 = vcmask 64512
    %v290 = vsel %vm288, %v287, 0
    %292 = vmatprep.subr.mxu0 0.0
    %293 = vmatpush1.msra.mxu0 %v58
    %294 = vmatprep.subr.mxu0 0.0
    %295 = vmatpush1.msra.mxu0 0.0
    %296 = vmatprep.subr.mxu0 0.0
    %297 = vmatpush1.msra.mxu0 0.0
    %298 = vmatprep.subr.mxu0 0.0
    %299 = vmatpush1.msra.mxu0 0.0
    %300 = vmatprep.subr.mxu0 0.0
    %301 = vmatpush1.msra.mxu0 0.0
    %302 = vmatprep.subr.mxu0 0.0
    %303 = vmatpush1.msra.mxu0 0.0
    %304 = vmatprep.subr.mxu0 0.0
    %305 = vmatpush1.msra.mxu0 0.0
    %306 = vmatprep.subr.mxu0 0.0
    %307 = vmatpush1.msra.mxu0 0.0
    %308 = vmatprep.subr.mxu0 0.0
    %309 = vmatpush1.msra.mxu0 0.0
    %310 = vmatprep.subr.mxu0 0.0
    %311 = vmatpush1.msra.mxu0 0.0
    %312 = vmatprep.subr.mxu0 0.0
    %313 = vmatpush1.msra.mxu0 0.0
    %314 = vmatprep.subr.mxu0 0.0
    %315 = vmatpush1.msra.mxu0 0.0
    %316 = vmatprep.subr.mxu0 0.0
    %317 = vmatpush1.msra.mxu0 0.0
    %318 = vmatprep.subr.mxu0 0.0
    %319 = vmatpush1.msra.mxu0 0.0
    %320 = vmatprep.subr.mxu0 0.0
    %321 = vmatpush1.msra.mxu0 0.0
    %322 = vmatprep.subr.mxu0 0.0
    %323 = vmatpush1.msra.mxu0 0.0
    %324 = vmatprep.subr.mxu0 0.0
    %325 = vmatpush1.msra.mxu0 0.0
    %326 = vmatprep.subr.mxu0 0.0
    %327 = vmatpush1.msra.mxu0 0.0
    %328 = vmatprep.subr.mxu0 0.0
    %329 = vmatpush1.msra.mxu0 0.0
    %330 = vmatprep.subr.mxu0 0.0
    %331 = vmatpush1.msra.mxu0 0.0
    %332 = vmatprep.subr.mxu0 0.0
    %333 = vmatpush1.msra.mxu0 0.0
    %334 = vmatprep.subr.mxu0 0.0
    %335 = vmatpush1.msra.mxu0 0.0
    %336 = vmatprep.subr.mxu0 0.0
    %337 = vmatpush1.msra.mxu0 0.0
    %338 = vmatprep.subr.mxu0 0.0
    %339 = vmatpush1.msra.mxu0 0.0
    %340 = vmatprep.subr.mxu0 0.0
    %341 = vmatpush1.msra.mxu0 0.0
    %342 = vmatprep.subr.mxu0 0.0
    %343 = vmatpush1.msra.mxu0 0.0
    %344 = vmatprep.subr.mxu0 0.0
    %345 = vmatpush1.msra.mxu0 0.0
    %346 = vmatprep.subr.mxu0 0.0
    %347 = vmatpush1.msra.mxu0 0.0
    %348 = vmatprep.subr.mxu0 0.0
    %349 = vmatpush1.msra.mxu0 0.0
    %350 = vmatprep.subr.mxu0 0.0
    %351 = vmatpush1.msra.mxu0 0.0
    %352 = vmatprep.subr.mxu0 0.0
    %353 = vmatpush1.msra.mxu0 0.0
    %354 = vmatprep.subr.mxu0 0.0
    %355 = vmatpush1.msra.mxu0 0.0
    %356 = vmatprep.mubr.f32.mxu0 0.0
    %357 = vmatmul.mubr.f32.gmra.mrb[0].mxu0 %v290
    %v358 = vpop.f32.mrb[0].mxu0
    %v359 = vadd.f32 0.0, %v358
    %v360 = vpop.f32.mrb[0].mxu0
    %361 = vdwg.mxu0
    %v362 = vpack.c.bf16 %v200, %v200
    %v363 = vpack.c.bf16 %v359, %v359
    %v368 = vunpack.c.l.b16 %v47
    %v369 = vunpack.c.l.b16 %v48
    %v370 = vunpack.c.l.b16 %v49
    %v371 = vunpack.c.l.b16 %v50
    %v372 = vpack.c.b16 %v369, %v368
    %v373 = vpack.c.b16 %v371, %v370
    %v377 = vsel %vm77, %v363, 0
    %379 = vmatprep.subr.bf16.mxu0 0
    %380 = vmatpush1.bf16.msra.mxu0 %v372
    %381 = vmatprep.subr.bf16.mxu0 0
    %382 = vmatpush1.bf16.msra.mxu0 %v373
    %383 = vmatprep.subr.bf16.mxu0 0
    %384 = vmatpush1.bf16.msra.mxu0 0
    %385 = vmatprep.subr.bf16.mxu0 0
    %386 = vmatpush1.bf16.msra.mxu0 0
    %387 = vmatprep.subr.bf16.mxu0 0
    %388 = vmatpush1.bf16.msra.mxu0 0
    %389 = vmatprep.subr.bf16.mxu0 0
    %390 = vmatpush1.bf16.msra.mxu0 0
    %391 = vmatprep.subr.bf16.mxu0 0
    %392 = vmatpush1.bf16.msra.mxu0 0
    %393 = vmatprep.subr.bf16.mxu0 0
    %394 = vmatpush1.bf16.msra.mxu0 0
    %395 = vmatprep.subr.bf16.mxu0 0
    %396 = vmatpush1.bf16.msra.mxu0 0
    %397 = vmatprep.subr.bf16.mxu0 0
    %398 = vmatpush1.bf16.msra.mxu0 0
    %399 = vmatprep.subr.bf16.mxu0 0
    %400 = vmatpush1.bf16.msra.mxu0 0
    %401 = vmatprep.subr.bf16.mxu0 0
    %402 = vmatpush1.bf16.msra.mxu0 0
    %403 = vmatprep.subr.bf16.mxu0 0
    %404 = vmatpush1.bf16.msra.mxu0 0
    %405 = vmatprep.subr.bf16.mxu0 0
    %406 = vmatpush1.bf16.msra.mxu0 0
    %407 = vmatprep.subr.bf16.mxu0 0
    %408 = vmatpush1.bf16.msra.mxu0 0
    %409 = vmatprep.subr.bf16.mxu0 0
    %410 = vmatpush1.bf16.msra.mxu0 0
    %411 = vmatprep.mubr.bf16.mxu0 0
    %412 = vmatmul.mubr.bf16.gmra.mrb[0].mxu0 %v377
    %v413 = vpop.f32.mrb[0].mxu0
    %v414 = vadd.f32 0.0, %v413
    %v415 = vpop.f32.mrb[0].mxu0
    %v416 = vpop.f32.mrb[0].mxu0
    %v417 = vpop.f32.mrb[0].mxu0
    %418 = vdwg.mxu0
    %420 = vrot.lane.b32.xlu0 %v362, 32
    %v421 = vpop.permute.xlu0 %420
    %v426 = vunpack.c.l.b16 %v43
    %v427 = vunpack.c.l.b16 %v44
    %v428 = vunpack.c.l.b16 %v45
    %v429 = vunpack.c.l.b16 %v46
    %v430 = vpack.c.b16 %v427, %v426
    %v431 = vpack.c.b16 %v429, %v428
    %v435 = vsel %vm77, %v421, 0
    %437 = vmatprep.subr.bf16.mxu0 0
    %438 = vmatpush1.bf16.msra.mxu0 %v430
    %439 = vmatprep.subr.bf16.mxu0 0
    %440 = vmatpush1.bf16.msra.mxu0 %v431
    %441 = vmatprep.subr.bf16.mxu0 0
    %442 = vmatpush1.bf16.msra.mxu0 0
    %443 = vmatprep.subr.bf16.mxu0 0
    %444 = vmatpush1.bf16.msra.mxu0 0
    %445 = vmatprep.subr.bf16.mxu0 0
    %446 = vmatpush1.bf16.msra.mxu0 0
    %447 = vmatprep.subr.bf16.mxu0 0
    %448 = vmatpush1.bf16.msra.mxu0 0
    %449 = vmatprep.subr.bf16.mxu0 0
    %450 = vmatpush1.bf16.msra.mxu0 0
    %451 = vmatprep.subr.bf16.mxu0 0
    %452 = vmatpush1.bf16.msra.mxu0 0
    %453 = vmatprep.subr.bf16.mxu0 0
    %454 = vmatpush1.bf16.msra.mxu0 0
    %455 = vmatprep.subr.bf16.mxu0 0
    %456 = vmatpush1.bf16.msra.mxu0 0
    %457 = vmatprep.subr.bf16.mxu0 0
    %458 = vmatpush1.bf16.msra.mxu0 0
    %459 = vmatprep.subr.bf16.mxu0 0
    %460 = vmatpush1.bf16.msra.mxu0 0
    %461 = vmatprep.subr.bf16.mxu0 0
    %462 = vmatpush1.bf16.msra.mxu0 0
    %463 = vmatprep.subr.bf16.mxu0 0
    %464 = vmatpush1.bf16.msra.mxu0 0
    %465 = vmatprep.subr.bf16.mxu0 0
    %466 = vmatpush1.bf16.msra.mxu0 0
    %467 = vmatprep.subr.bf16.mxu0 0
    %468 = vmatpush1.bf16.msra.mxu0 0
    %469 = vmatprep.mubr.bf16.mxu0 0
    %470 = vmatmul.mubr.bf16.gmra.mrb[0].mxu0 %v435
    %v471 = vpop.f32.mrb[0].mxu0
    %v472 = vadd.f32 %v414, %v471
    %v473 = vpop.f32.mrb[0].mxu0
    %v474 = vpop.f32.mrb[0].mxu0
    %v475 = vpop.f32.mrb[0].mxu0
    %476 = vdwg.mxu0
    %v477 = vadd.f32 %v472, %v52
    %v478 = vsel %vm77, %v477, %v194
    %479 = vst.msk [vmem:[#allocation2 + $0x1] sm:$0x1] %vm33, %v478
    %v480 = vadd.f32 %v477, %v53
    %481 = vst [vmem:[#allocation5] sm:$0x1] %v480
    %s482 = sld [smem:[#allocation4 + $0x1]]
    %s483 = scalar_lea.vmem [#allocation2], %s482
    %v484 = vld [vmem:[%s483] sm:$0x1]
    %v485 = vld [vmem:[%s1 + $0x1] sm:$0x1]
    %v486 = vpack.c.bf16 %v485, %v485
    %v487 = vpack.c.bf16 %v484, %v484
    %v489 = vsel %vm77, %v487, 0
    %491 = vmatprep.subr.bf16.mxu0 0
    %492 = vmatpush1.bf16.msra.mxu0 %v73
    %493 = vmatprep.subr.bf16.mxu0 0
    %494 = vmatpush1.bf16.msra.mxu0 %v74
    %495 = vmatprep.subr.bf16.mxu0 0
    %496 = vmatpush1.bf16.msra.mxu0 0
    %497 = vmatprep.subr.bf16.mxu0 0
    %498 = vmatpush1.bf16.msra.mxu0 0
    %499 = vmatprep.subr.bf16.mxu0 0
    %500 = vmatpush1.bf16.msra.mxu0 0
    %501 = vmatprep.subr.bf16.mxu0 0
    %502 = vmatpush1.bf16.msra.mxu0 0
    %503 = vmatprep.subr.bf16.mxu0 0
    %504 = vmatpush1.bf16.msra.mxu0 0
    %505 = vmatprep.subr.bf16.mxu0 0
    %506 = vmatpush1.bf16.msra.mxu0 0
    %507 = vmatprep.subr.bf16.mxu0 0
    %508 = vmatpush1.bf16.msra.mxu0 0
    %509 = vmatprep.subr.bf16.mxu0 0
    %510 = vmatpush1.bf16.msra.mxu0 0
    %511 = vmatprep.subr.bf16.mxu0 0
    %512 = vmatpush1.bf16.msra.mxu0 0
    %513 = vmatprep.subr.bf16.mxu0 0
    %514 = vmatpush1.bf16.msra.mxu0 0
    %515 = vmatprep.subr.bf16.mxu0 0
    %516 = vmatpush1.bf16.msra.mxu0 0
    %517 = vmatprep.subr.bf16.mxu0 0
    %518 = vmatpush1.bf16.msra.mxu0 0
    %519 = vmatprep.subr.bf16.mxu0 0
    %520 = vmatpush1.bf16.msra.mxu0 0
    %521 = vmatprep.subr.bf16.mxu0 0
    %522 = vmatpush1.bf16.msra.mxu0 0
    %523 = vmatprep.mubr.bf16.mxu0 0
    %524 = vmatmul.mubr.bf16.gmra.mrb[0].mxu0 %v489
    %v525 = vpop.f32.mrb[0].mxu0
    %v526 = vadd.f32 0.0, %v525
    %v527 = vpop.f32.mrb[0].mxu0
    %v528 = vpop.f32.mrb[0].mxu0
    %v529 = vpop.f32.mrb[0].mxu0
    %530 = vdwg.mxu0
    %v532 = vsel %vm77, %v486, 0
    %534 = vmatprep.subr.bf16.mxu0 0
    %535 = vmatpush1.bf16.msra.mxu0 %v129
    %536 = vmatprep.subr.bf16.mxu0 0
    %537 = vmatpush1.bf16.msra.mxu0 %v130
    %538 = vmatprep.subr.bf16.mxu0 0
    %539 = vmatpush1.bf16.msra.mxu0 0
    %540 = vmatprep.subr.bf16.mxu0 0
    %541 = vmatpush1.bf16.msra.mxu0 0
    %542 = vmatprep.subr.bf16.mxu0 0
    %543 = vmatpush1.bf16.msra.mxu0 0
    %544 = vmatprep.subr.bf16.mxu0 0
    %545 = vmatpush1.bf16.msra.mxu0 0
    %546 = vmatprep.subr.bf16.mxu0 0
    %547 = vmatpush1.bf16.msra.mxu0 0
    %548 = vmatprep.subr.bf16.mxu0 0
    %549 = vmatpush1.bf16.msra.mxu0 0
    %550 = vmatprep.subr.bf16.mxu0 0
    %551 = vmatpush1.bf16.msra.mxu0 0
    %552 = vmatprep.subr.bf16.mxu0 0
    %553 = vmatpush1.bf16.msra.mxu0 0
    %554 = vmatprep.subr.bf16.mxu0 0
    %555 = vmatpush1.bf16.msra.mxu0 0
    %556 = vmatprep.subr.bf16.mxu0 0
    %557 = vmatpush1.bf16.msra.mxu0 0
    %558 = vmatprep.subr.bf16.mxu0 0
    %559 = vmatpush1.bf16.msra.mxu0 0
    %560 = vmatprep.subr.bf16.mxu0 0
    %561 = vmatpush1.bf16.msra.mxu0 0
    %562 = vmatprep.subr.bf16.mxu0 0
    %563 = vmatpush1.bf16.msra.mxu0 0
    %564 = vmatprep.subr.bf16.mxu0 0
    %565 = vmatpush1.bf16.msra.mxu0 0
    %566 = vmatprep.mubr.bf16.mxu0 0
    %567 = vmatmul.mubr.bf16.gmra.mrb[0].mxu0 %v532
    %v568 = vpop.f32.mrb[0].mxu0
    %v569 = vadd.f32 %v526, %v568
    %v570 = vpop.f32.mrb[0].mxu0
    %v571 = vpop.f32.mrb[0].mxu0
    %v572 = vpop.f32.mrb[0].mxu0
    %573 = vdwg.mxu0
    %v574 = vadd.f32 %v569, %v51
    %v575 = vxor.u32 %v574, 2147483648
    %v576 = vmul.f32 %v575, 1.442695
    %v577 = vpow.pop %v576
    %v578 = vadd.f32 %v577, 1.0
    %v579 = vrcp.pop %v578
    %v580 = vmul.f32 1.0, %v579
    %v581 = vtanh.pop %v574
    %v582 = vmul.f32 %v580, %v484
    %584 = vrot.lane.b32.xlu0 %v581, 64
    %v585 = vpop.permute.xlu0 %584
    %v587 = vmul.f32 %v580, %v585
    %589 = vrot.lane.b32.xlu0 %v587, 32
    %v590 = vpop.permute.xlu0 %589
    %v592 = vadd.f32 %v582, %v590
    %v593 = vtanh.pop %v592
    %595 = vrot.lane.b32.xlu0 %v593, 64
    %v596 = vpop.permute.xlu0 %595
    %v598 = vmul.f32 %v580, %v596
    %600 = vrot.lane.b32.xlu0 %v598, 32
    %v601 = vpop.permute.xlu0 %600
    %v602 = vsel %vm77, %v601, 0
    %604 = vmatprep.subr.mxu0 0.0
    %605 = vmatpush1.msra.mxu0 %v54
    %606 = vmatprep.subr.mxu0 0.0
    %607 = vmatpush1.msra.mxu0 %v55
    %608 = vmatprep.subr.mxu0 0.0
    %609 = vmatpush1.msra.mxu0 %v56
    %610 = vmatprep.subr.mxu0 0.0
    %611 = vmatpush1.msra.mxu0 %v57
    %612 = vmatprep.subr.mxu0 0.0
    %613 = vmatpush1.msra.mxu0 0.0
    %614 = vmatprep.subr.mxu0 0.0
    %615 = vmatpush1.msra.mxu0 0.0
    %616 = vmatprep.subr.mxu0 0.0
    %617 = vmatpush1.msra.mxu0 0.0
    %618 = vmatprep.subr.mxu0 0.0
    %619 = vmatpush1.msra.mxu0 0.0
    %620 = vmatprep.subr.mxu0 0.0
    %621 = vmatpush1.msra.mxu0 0.0
    %622 = vmatprep.subr.mxu0 0.0
    %623 = vmatpush1.msra.mxu0 0.0
    %624 = vmatprep.subr.mxu0 0.0
    %625 = vmatpush1.msra.mxu0 0.0
    %626 = vmatprep.subr.mxu0 0.0
    %627 = vmatpush1.msra.mxu0 0.0
    %628 = vmatprep.subr.mxu0 0.0
    %629 = vmatpush1.msra.mxu0 0.0
    %630 = vmatprep.subr.mxu0 0.0
    %631 = vmatpush1.msra.mxu0 0.0
    %632 = vmatprep.subr.mxu0 0.0
    %633 = vmatpush1.msra.mxu0 0.0
    %634 = vmatprep.subr.mxu0 0.0
    %635 = vmatpush1.msra.mxu0 0.0
    %636 = vmatprep.subr.mxu0 0.0
    %637 = vmatpush1.msra.mxu0 0.0
    %638 = vmatprep.subr.mxu0 0.0
    %639 = vmatpush1.msra.mxu0 0.0
    %640 = vmatprep.subr.mxu0 0.0
    %641 = vmatpush1.msra.mxu0 0.0
    %642 = vmatprep.subr.mxu0 0.0
    %643 = vmatpush1.msra.mxu0 0.0
    %644 = vmatprep.subr.mxu0 0.0
    %645 = vmatpush1.msra.mxu0 0.0
    %646 = vmatprep.subr.mxu0 0.0
    %647 = vmatpush1.msra.mxu0 0.0
    %648 = vmatprep.subr.mxu0 0.0
    %649 = vmatpush1.msra.mxu0 0.0
    %650 = vmatprep.subr.mxu0 0.0
    %651 = vmatpush1.msra.mxu0 0.0
    %652 = vmatprep.subr.mxu0 0.0
    %653 = vmatpush1.msra.mxu0 0.0
    %654 = vmatprep.subr.mxu0 0.0
    %655 = vmatpush1.msra.mxu0 0.0
    %656 = vmatprep.subr.mxu0 0.0
    %657 = vmatpush1.msra.mxu0 0.0
    %658 = vmatprep.subr.mxu0 0.0
    %659 = vmatpush1.msra.mxu0 0.0
    %660 = vmatprep.subr.mxu0 0.0
    %661 = vmatpush1.msra.mxu0 0.0
    %662 = vmatprep.subr.mxu0 0.0
    %663 = vmatpush1.msra.mxu0 0.0
    %664 = vmatprep.subr.mxu0 0.0
    %665 = vmatpush1.msra.mxu0 0.0
    %666 = vmatprep.subr.mxu0 0.0
    %667 = vmatpush1.msra.mxu0 0.0
    %668 = vmatprep.mubr.f32.mxu0 0.0
    %669 = vmatmul.mubr.f32.gmra.mrb[0].mxu0 %v602
    %v670 = vpop.f32.mrb[0].mxu0
    %v671 = vadd.f32 0.0, %v670
    %v672 = vpop.f32.mrb[0].mxu0
    %673 = vdwg.mxu0
    %v674 = vsel %vm276, %v671, -inf
    %675 = vmax.xlane.f32.xlu0 %v674
    %v676 = vpop.xlane.xlu0 %675
    %v677 = vsub.f32 %v671, %v676
    %v678 = vmul.f32 %v677, 1.442695
    %v679 = vpow.pop %v678
    %v680 = vsel %vm276, %v679, 0.0
    %681 = vadd.xlane.f32.xlu0 %v680
    %v682 = vpop.xlane.xlu0 %681
    %v683 = vrcp.pop %v682
    %v684 = vmul.f32 %v679, %v683
    %v686 = vsel %vm288, %v684, 0
    %688 = vmatprep.subr.mxu0 0.0
    %689 = vmatpush1.msra.mxu0 %v58
    %690 = vmatprep.subr.mxu0 0.0
    %691 = vmatpush1.msra.mxu0 0.0
    %692 = vmatprep.subr.mxu0 0.0
    %693 = vmatpush1.msra.mxu0 0.0
    %694 = vmatprep.subr.mxu0 0.0
    %695 = vmatpush1.msra.mxu0 0.0
    %696 = vmatprep.subr.mxu0 0.0
    %697 = vmatpush1.msra.mxu0 0.0
    %698 = vmatprep.subr.mxu0 0.0
    %699 = vmatpush1.msra.mxu0 0.0
    %700 = vmatprep.subr.mxu0 0.0
    %701 = vmatpush1.msra.mxu0 0.0
    %702 = vmatprep.subr.mxu0 0.0
    %703 = vmatpush1.msra.mxu0 0.0
    %704 = vmatprep.subr.mxu0 0.0
    %705 = vmatpush1.msra.mxu0 0.0
    %706 = vmatprep.subr.mxu0 0.0
    %707 = vmatpush1.msra.mxu0 0.0
    %708 = vmatprep.subr.mxu0 0.0
    %709 = vmatpush1.msra.mxu0 0.0
    %710 = vmatprep.subr.mxu0 0.0
    %711 = vmatpush1.msra.mxu0 0.0
    %712 = vmatprep.subr.mxu0 0.0
    %713 = vmatpush1.msra.mxu0 0.0
    %714 = vmatprep.subr.mxu0 0.0
    %715 = vmatpush1.msra.mxu0 0.0
    %716 = vmatprep.subr.mxu0 0.0
    %717 = vmatpush1.msra.mxu0 0.0
    %718 = vmatprep.subr.mxu0 0.0
    %719 = vmatpush1.msra.mxu0 0.0
    %720 = vmatprep.subr.mxu0 0.0
    %721 = vmatpush1.msra.mxu0 0.0
    %722 = vmatprep.subr.mxu0 0.0
    %723 = vmatpush1.msra.mxu0 0.0
    %724 = vmatprep.subr.mxu0 0.0
    %725 = vmatpush1.msra.mxu0 0.0
    %726 = vmatprep.subr.mxu0 0.0
    %727 = vmatpush1.msra.mxu0 0.0
    %728 = vmatprep.subr.mxu0 0.0
    %729 = vmatpush1.msra.mxu0 0.0
    %730 = vmatprep.subr.mxu0 0.0
    %731 = vmatpush1.msra.mxu0 0.0
    %732 = vmatprep.subr.mxu0 0.0
    %733 = vmatpush1.msra.mxu0 0.0
    %734 = vmatprep.subr.mxu0 0.0
    %735 = vmatpush1.msra.mxu0 0.0
    %736 = vmatprep.subr.mxu0 0.0
    %737 = vmatpush1.msra.mxu0 0.0
    %738 = vmatprep.subr.mxu0 0.0
    %739 = vmatpush1.msra.mxu0 0.0
    %740 = vmatprep.subr.mxu0 0.0
    %741 = vmatpush1.msra.mxu0 0.0
    %742 = vmatprep.subr.mxu0 0.0
    %743 = vmatpush1.msra.mxu0 0.0
    %744 = vmatprep.subr.mxu0 0.0
    %745 = vmatpush1.msra.mxu0 0.0
    %746 = vmatprep.subr.mxu0 0.0
    %747 = vmatpush1.msra.mxu0 0.0
    %748 = vmatprep.subr.mxu0 0.0
    %749 = vmatpush1.msra.mxu0 0.0
    %750 = vmatprep.subr.mxu0 0.0
    %751 = vmatpush1.msra.mxu0 0.0
    %752 = vmatprep.mubr.f32.mxu0 0.0
    %753 = vmatmul.mubr.f32.gmra.mrb[0].mxu0 %v686
    %v754 = vpop.f32.mrb[0].mxu0
    %v755 = vadd.f32 0.0, %v754
    %v756 = vpop.f32.mrb[0].mxu0
    %757 = vdwg.mxu0
    %v758 = vpack.c.bf16 %v598, %v598
    %v759 = vpack.c.bf16 %v755, %v755
    %v761 = vsel %vm77, %v759, 0
    %763 = vmatprep.subr.bf16.mxu0 0
    %764 = vmatpush1.bf16.msra.mxu0 %v372
    %765 = vmatprep.subr.bf16.mxu0 0
    %766 = vmatpush1.bf16.msra.mxu0 %v373
    %767 = vmatprep.subr.bf16.mxu0 0
    %768 = vmatpush1.bf16.msra.mxu0 0
    %769 = vmatprep.subr.bf16.mxu0 0
    %770 = vmatpush1.bf16.msra.mxu0 0
    %771 = vmatprep.subr.bf16.mxu0 0
    %772 = vmatpush1.bf16.msra.mxu0 0
    %773 = vmatprep.subr.bf16.mxu0 0
    %774 = vmatpush1.bf16.msra.mxu0 0
    %775 = vmatprep.subr.bf16.mxu0 0
    %776 = vmatpush1.bf16.msra.mxu0 0
    %777 = vmatprep.subr.bf16.mxu0 0
    %778 = vmatpush1.bf16.msra.mxu0 0
    %779 = vmatprep.subr.bf16.mxu0 0
    %780 = vmatpush1.bf16.msra.mxu0 0
    %781 = vmatprep.subr.bf16.mxu0 0
    %782 = vmatpush1.bf16.msra.mxu0 0
    %783 = vmatprep.subr.bf16.mxu0 0
    %784 = vmatpush1.bf16.msra.mxu0 0
    %785 = vmatprep.subr.bf16.mxu0 0
    %786 = vmatpush1.bf16.msra.mxu0 0
    %787 = vmatprep.subr.bf16.mxu0 0
    %788 = vmatpush1.bf16.msra.mxu0 0
    %789 = vmatprep.subr.bf16.mxu0 0
    %790 = vmatpush1.bf16.msra.mxu0 0
    %791 = vmatprep.subr.bf16.mxu0 0
    %792 = vmatpush1.bf16.msra.mxu0 0
    %793 = vmatprep.subr.bf16.mxu0 0
    %794 = vmatpush1.bf16.msra.mxu0 0
    %795 = vmatprep.mubr.bf16.mxu0 0
    %796 = vmatmul.mubr.bf16.gmra.mrb[0].mxu0 %v761
    %v797 = vpop.f32.mrb[0].mxu0
    %v798 = vadd.f32 0.0, %v797
    %v799 = vpop.f32.mrb[0].mxu0
    %v800 = vpop.f32.mrb[0].mxu0
    %v801 = vpop.f32.mrb[0].mxu0
    %802 = vdwg.mxu0
    %804 = vrot.lane.b32.xlu0 %v758, 32
    %v805 = vpop.permute.xlu0 %804
    %v807 = vsel %vm77, %v805, 0
    %809 = vmatprep.subr.bf16.mxu0 0
    %810 = vmatpush1.bf16.msra.mxu0 %v430
    %811 = vmatprep.subr.bf16.mxu0 0
    %812 = vmatpush1.bf16.msra.mxu0 %v431
    %813 = vmatprep.subr.bf16.mxu0 0
    %814 = vmatpush1.bf16.msra.mxu0 0
    %815 = vmatprep.subr.bf16.mxu0 0
    %816 = vmatpush1.bf16.msra.mxu0 0
    %817 = vmatprep.subr.bf16.mxu0 0
    %818 = vmatpush1.bf16.msra.mxu0 0
    %819 = vmatprep.subr.bf16.mxu0 0
    %820 = vmatpush1.bf16.msra.mxu0 0
    %821 = vmatprep.subr.bf16.mxu0 0
    %822 = vmatpush1.bf16.msra.mxu0 0
    %823 = vmatprep.subr.bf16.mxu0 0
    %824 = vmatpush1.bf16.msra.mxu0 0
    %825 = vmatprep.subr.bf16.mxu0 0
    %826 = vmatpush1.bf16.msra.mxu0 0
    %827 = vmatprep.subr.bf16.mxu0 0
    %828 = vmatpush1.bf16.msra.mxu0 0
    %829 = vmatprep.subr.bf16.mxu0 0
    %830 = vmatpush1.bf16.msra.mxu0 0
    %831 = vmatprep.subr.bf16.mxu0 0
    %832 = vmatpush1.bf16.msra.mxu0 0
    %833 = vmatprep.subr.bf16.mxu0 0
    %834 = vmatpush1.bf16.msra.mxu0 0
    %835 = vmatprep.subr.bf16.mxu0 0
    %836 = vmatpush1.bf16.msra.mxu0 0
    %837 = vmatprep.subr.bf16.mxu0 0
    %838 = vmatpush1.bf16.msra.mxu0 0
    %839 = vmatprep.subr.bf16.mxu0 0
    %840 = vmatpush1.bf16.msra.mxu0 0
    %841 = vmatprep.mubr.bf16.mxu0 0
    %842 = vmatmul.mubr.bf16.gmra.mrb[0].mxu0 %v807
    %v843 = vpop.f32.mrb[0].mxu0
    %v844 = vadd.f32 %v798, %v843
    %v845 = vpop.f32.mrb[0].mxu0
    %v846 = vpop.f32.mrb[0].mxu0
    %v847 = vpop.f32.mrb[0].mxu0
    %848 = vdwg.mxu0
    %v849 = vadd.f32 %v844, %v52
    %v850 = vsel %vm77, %v849, %v592
    %851 = vst.msk [vmem:[#allocation2 + $0x2] sm:$0x1] %vm33, %v850
    %v852 = vadd.f32 %v849, %v53
    %853 = vst [vmem:[#allocation5 + $0x1] sm:$0x1] %v852
    // Predicated region
    $region26: #{_decode_tree.1} parent=1 // pred_check
      _
    $region27: #{_decode_tree.1} parent=1 // pred_check_branch
      %855 = sbr.rel (0) target = $region29
    $region28: #{_decode_tree.1} parent=1 // pred_region
      %s857 = ssub.s32 32, 32
      %858 = vsyncadd [#allocation6], %s857
      %s860 = sshll.u32 [#allocation5], 4
      %s861 = int_to_ptr.vmem [resolvable:$true] %s860
      %863 = dma.vmem_to_hbm [thread:$0]  %s861, 32, %s7, [#allocation6]
    $region29: #{_decode_tree.1} parent=1 // pred_fallthru
      _
    // Predicated region
    $region30: #{_decode_tree.1} parent=1 // pred_check
      _
    $region31: #{_decode_tree.1} parent=1 // pred_check_branch
      %865 = sbr.rel (0) target = $region33
    $region32: #{_decode_tree.1} parent=1 // pred_region
      %866 = dma.done [#allocation6], 32
    $region33: #{_decode_tree.1} parent=1 // pred_fallthru
      _
    %867 = vsyncpa [#allocation6], 1

</llo_original>
